<compile_context>
chip_gen: v5e
topology: v5e:2x2
jax: 0.10.0
libtpu: 0.0.40
codegen_flags: <defaults>
</compile_context>

<pallas_src>
import jax
import jax.numpy as jnp
from jax.experimental import pallas as pl
from jax.experimental.pallas import tpu as pltpu


def attention_kernel(x_ref, w2_ref, expand_ref, gsum_ref, o_ref):
    # x_ref:      (bb, T*H) lane-dense rows of flattened lstm_out (native dtype)
    # w2_ref:     (T*H, T)  bf16 block-diagonal copies of the attn weight
    # expand_ref: (T, T*H)  bf16 block-diagonal ones (broadcast weights over H)
    # gsum_ref:   (T*H, H)  bf16 stacked identities (sum over the T groups)
    # o_ref:      (bb, H)   context output tile
    f32 = jnp.float32
    xv = x_ref[...]                                   # (bb, T*H)
    x32 = xv.astype(f32)
    xbf = xv.astype(jnp.bfloat16)

    # scores[b, t] = <x[b, t, :], w>   (one tiny MXU matmul, f32 accumulate).
    # The Linear bias is dropped: softmax over the time axis is invariant to
    # adding the same scalar to every score.
    s = jnp.dot(xbf, w2_ref[...], preferred_element_type=f32)          # (bb, T)

    # Softmax over time (now the lane axis of s) -- 2-D temporaries only.
    m = jnp.max(s, axis=-1, keepdims=True)                             # (bb, 1)
    e = jnp.exp(s - m)                                                 # (bb, T)
    denom = jnp.sum(e, axis=-1, keepdims=True)                         # (bb, 1)

    # Broadcast the unnormalized weights across each time step's H lanes and
    # reduce over time -- two more tiny matmuls on the otherwise-idle MXU.
    e_exp = jnp.dot(e.astype(jnp.bfloat16), expand_ref[...],
                    preferred_element_type=f32)                        # (bb, T*H)
    num = jnp.dot((e_exp * x32).astype(jnp.bfloat16), gsum_ref[...],
                  preferred_element_type=f32)                          # (bb, H)

    # Single normalization per output element; EUP approximate reciprocal
    # (free VLIW slot; bf16-level accuracy, matching the bf16 MXU operands).
    o_ref[...] = (num * pl.reciprocal(denom, approx=True)).astype(o_ref.dtype)


def _round_up(n, m):
    return ((n + m - 1) // m) * m


def _pick_block_batch(B, T, H, dtype):
    """Batch rows per grid step.

    Targets ~1 MiB of real HBM input per step (measured roofline-saturation
    point on v5e/v6e/v7x) and >= 8 grid steps whenever the batch is big enough
    that each step still moves a non-trivial (>= ~64 KiB) tile, so v7x's two
    TensorCores each get >= 4 double-buffered steps.
    """
    row_bytes = T * H * jnp.dtype(dtype).itemsize
    bb = max(1, (1 << 20) // max(row_bytes, 1))            # ~1 MiB tiles
    min_steps, min_tile = 8, 64 << 10
    if B * row_bytes >= min_steps * min_tile:
        bb = min(bb, max(8, ((B // min_steps) // 8) * 8))
    bb = min(bb, B)
    if B >= 8:
        bb = max(8, (bb // 8) * 8)                         # sublane-aligned blocks
    return bb


def _vmem_limit_bytes(bb, T, H, dtype):
    """Pad-aware VMEM request, clamped to a modest 16-32 MiB on every gen."""
    item = jnp.dtype(dtype).itemsize
    rows = _round_up(max(bb, 8), 8)
    lanes = _round_up(T * H, 128)
    in_blk = 2 * rows * lanes * item                        # double-buffered input
    out_blk = 2 * rows * _round_up(H, 128) * max(item, 2)   # double-buffered output (lane-padded)
    consts = 2 * 2 * (_round_up(T * H, 8) * _round_up(T, 128)
                      + _round_up(T, 8) * _round_up(T * H, 128)
                      + _round_up(T * H, 8) * _round_up(H, 128))   # bf16 constants
    temps = rows * (4 * lanes + 4 * 128) * 4                # f32 elementwise temporaries
    need = in_blk + out_blk + consts + temps + (4 << 20)    # + compiler scratch headroom
    return int(min(max(need, 16 << 20), 32 << 20))


def attention_forward(lstm_out, w, b=None, *, block_batch=None):
    """lstm_out: (B, T, H); w: (1, H) PyTorch Linear weight; b: (1,) bias.

    The bias is accepted for API parity but unused: softmax over the time
    axis is invariant to adding the same scalar to every score.
    """
    B, T, H = lstm_out.shape
    x2d = lstm_out.reshape(B, T * H)           # free row-major reshape -> lane-dense rows

    w_col = jnp.asarray(w, jnp.float32).reshape(H, 1)
    eye_t = jnp.eye(T, dtype=jnp.float32)
    # scores:  x2d @ score_mat,   score_mat[t*H+h, t'] = (t == t') * w[h]
    score_mat = jnp.kron(eye_t, w_col).astype(jnp.bfloat16)                    # (T*H, T)
    # broadcast: e @ expand_mat,  expand_mat[t, t'*H+h] = (t == t')
    expand_mat = jnp.kron(eye_t, jnp.ones((1, H), jnp.float32)).astype(jnp.bfloat16)  # (T, T*H)
    # group sum: y @ gsum_mat,    gsum_mat[t*H+h', h] = (h' == h)
    gsum_mat = jnp.tile(jnp.eye(H, dtype=jnp.float32), (T, 1)).astype(jnp.bfloat16)   # (T*H, H)

    bb = block_batch or _pick_block_batch(B, T, H, lstm_out.dtype)
    grid = (pl.cdiv(B, bb),)
    vmem_limit = _vmem_limit_bytes(bb, T, H, lstm_out.dtype)

    # NOTE: if a profile on v6e still shows exposed per-step DMA, bump the
    # input spec to pipeline_mode=pl.Buffered(3); default double-buffering is
    # sufficient at ~1 MiB tiles.
    return pl.pallas_call(
        attention_kernel,
        out_shape=jax.ShapeDtypeStruct((B, H), lstm_out.dtype),
        grid_spec=pltpu.PrefetchScalarGridSpec(
            num_scalar_prefetch=0,
            grid=grid,
            in_specs=[
                pl.BlockSpec((bb, T * H), lambda i: (i, 0)),
                pl.BlockSpec((T * H, T), lambda i: (0, 0)),
                pl.BlockSpec((T, T * H), lambda i: (0, 0)),
                pl.BlockSpec((T * H, H), lambda i: (0, 0)),
            ],
            out_specs=pl.BlockSpec((bb, H), lambda i: (i, 0)),
        ),
        compiler_params=pltpu.CompilerParams(
            dimension_semantics=("parallel",),
            vmem_limit_bytes=vmem_limit,
        ),
    )(x2d, score_mat, expand_mat, gsum_mat)


def attention_ref(lstm_out, w, b):
    """Pure-JAX reference matching the PyTorch forward exactly (bias included)."""
    scores = jnp.sum(lstm_out * jnp.reshape(w, (1, 1, -1)), axis=-1, keepdims=True) + b
    weights = jax.nn.softmax(scores, axis=1)                      # over time
    return jnp.sum(weights * lstm_out, axis=1)                    # (B, H)


if __name__ == "__main__":
    key = jax.random.PRNGKey(0)
    k_x, k_w, k_b, k_x2 = jax.random.split(key, 4)

    B, T, H = 2, 8, 32
    lstm_out = jax.random.normal(k_x, (B, T, H), dtype=jnp.float32)
    # Deterministic "Linear(hidden_dim, 1)" parameters (synthetic).
    w = jax.random.normal(k_w, (1, H), dtype=jnp.float32) * (1.0 / jnp.sqrt(H))
    b = jax.random.normal(k_b, (1,), dtype=jnp.float32) * 0.1

    out = jax.block_until_ready(attention_forward(lstm_out, w, b))
    ref = attention_ref(lstm_out, w, b)
    assert out.shape == (B, H)
    # MXU operands are deliberately bf16 (f32 accumulation) and the softmax
    # denominator uses the EUP approximate reciprocal: compare at bf16-level
    # tolerance against the exact f32 reference.
    assert jnp.allclose(out, ref, atol=2e-2, rtol=2e-2), "mismatch vs reference (small)"

    # Exercise the multi-step, double-buffered grid path as well.
    B2 = 64
    lstm_out2 = jax.random.normal(k_x2, (B2, T, H), dtype=jnp.float32)
    out2 = jax.block_until_ready(attention_forward(lstm_out2, w, b, block_batch=8))
    ref2 = attention_ref(lstm_out2, w, b)
    assert out2.shape == (B2, H)
    assert jnp.allclose(out2, ref2, atol=2e-2, rtol=2e-2), "mismatch vs reference (tiled)"

    print("KERNEL_OK")
</pallas_src>

<mosaic_0001>
module attributes {stable_mosaic.version = 11 : i64} {
  func.func @attention_kernel(%arg0: i32, %arg1: memref<2x256xf32, #tpu.memory_space<vmem>>, %arg2: memref<256x8xbf16, #tpu.memory_space<vmem>>, %arg3: memref<8x256xbf16, #tpu.memory_space<vmem>>, %arg4: memref<256x32xbf16, #tpu.memory_space<vmem>>, %arg5: memref<2x32xf32, #tpu.memory_space<vmem>>) attributes {dimension_semantics = [#tpu.dimension_semantics<parallel>], iteration_bounds = array<i64: 1>, scalar_prefetch = 0 : i64, scratch_operands = 0 : i64, tpu.core_type = #tpu.core_type<tc>, window_params = [{transform_indices = @transform_0, window_bounds = array<i64: 2, 256>}, {pipeline_mode = #tpu.pipeline_mode<synchronous>, transform_indices = @transform_1, window_bounds = array<i64: 256, 8>}, {pipeline_mode = #tpu.pipeline_mode<synchronous>, transform_indices = @transform_2, window_bounds = array<i64: 8, 256>}, {pipeline_mode = #tpu.pipeline_mode<synchronous>, transform_indices = @transform_3, window_bounds = array<i64: 256, 32>}, {transform_indices = @transform_4, window_bounds = array<i64: 2, 32>}]} {
    %c0 = arith.constant 0 : index
    %c0_0 = arith.constant 0 : index
    %0 = vector.load %arg1[%c0, %c0_0] : memref<2x256xf32, #tpu.memory_space<vmem>>, vector<2x256xf32>
    %1 = arith.truncf %0 : vector<2x256xf32> to vector<2x256xbf16>
    %c0_1 = arith.constant 0 : index
    %c0_2 = arith.constant 0 : index
    %2 = vector.load %arg2[%c0_1, %c0_2] : memref<256x8xbf16, #tpu.memory_space<vmem>>, vector<256x8xbf16>
    %cst = arith.constant dense<0.000000e+00> : vector<2x8xf32>
    %3 = tpu.matmul %1, %2, %cst {dimension_numbers = #tpu.dot_dimension_numbers<[1], [0], [0], [1], [0, 0, 1, 1], [], []>} : vector<2x256xbf16>, vector<256x8xbf16>, vector<2x8xf32> -> vector<2x8xf32>
    %cst_3 = arith.constant dense<0xFF800000> : vector<2xf32>
    %4 = vector.multi_reduction <maximumf>, %3, %cst_3 [1] : vector<2x8xf32> to vector<2xf32>
    %5 = vector.shape_cast %4 : vector<2xf32> to vector<2x1xf32>
    %6 = vector.broadcast %5 : vector<2x1xf32> to vector<2x8xf32>
    %7 = arith.subf %3, %6 : vector<2x8xf32>
    %8 = math.exp %7 : vector<2x8xf32>
    %cst_4 = arith.constant dense<0.000000e+00> : vector<2xf32>
    %9 = vector.multi_reduction <add>, %8, %cst_4 [1] : vector<2x8xf32> to vector<2xf32>
    %10 = vector.shape_cast %9 : vector<2xf32> to vector<2x1xf32>
    %11 = arith.truncf %8 : vector<2x8xf32> to vector<2x8xbf16>
    %c0_5 = arith.constant 0 : index
    %c0_6 = arith.constant 0 : index
    %12 = vector.load %arg3[%c0_5, %c0_6] : memref<8x256xbf16, #tpu.memory_space<vmem>>, vector<8x256xbf16>
    %cst_7 = arith.constant dense<0.000000e+00> : vector<2x256xf32>
    %13 = tpu.matmul %11, %12, %cst_7 {dimension_numbers = #tpu.dot_dimension_numbers<[1], [0], [0], [1], [0, 0, 1, 1], [], []>} : vector<2x8xbf16>, vector<8x256xbf16>, vector<2x256xf32> -> vector<2x256xf32>
    %14 = arith.mulf %13, %0 : vector<2x256xf32>
    %15 = arith.truncf %14 : vector<2x256xf32> to vector<2x256xbf16>
    %c0_8 = arith.constant 0 : index
    %c0_9 = arith.constant 0 : index
    %16 = vector.load %arg4[%c0_8, %c0_9] : memref<256x32xbf16, #tpu.memory_space<vmem>>, vector<256x32xbf16>
    %cst_10 = arith.constant dense<0.000000e+00> : vector<2x32xf32>
    %17 = tpu.matmul %15, %16, %cst_10 {dimension_numbers = #tpu.dot_dimension_numbers<[1], [0], [0], [1], [0, 0, 1, 1], [], []>} : vector<2x256xbf16>, vector<256x32xbf16>, vector<2x32xf32> -> vector<2x32xf32>
    %18 = tpu.reciprocal %10 {approx = true} : vector<2x1xf32> -> vector<2x1xf32>
    %19 = vector.broadcast %18 : vector<2x1xf32> to vector<2x32xf32>
    %20 = arith.mulf %17, %19 : vector<2x32xf32>
    %c0_11 = arith.constant 0 : index
    %c0_12 = arith.constant 0 : index
    %21 = vector.load %arg5[%c0_11, %c0_12] : memref<2x32xf32, #tpu.memory_space<vmem>>, vector<2x32xf32>
    tpu.vector_store %arg5[%c0_11, %c0_12], %20 {strides = array<i32>} : memref<2x32xf32, #tpu.memory_space<vmem>>, vector<2x32xf32>,
    return
  }
  func.func @transform_0(%arg0: i32) -> (i32, i32) {
    %c0_i32 = arith.constant 0 : i32
    %c0_i32_0 = arith.constant 0 : i32
    return %arg0, %c0_i32 : i32, i32
  }
  func.func @transform_1(%arg0: i32) -> (i32, i32) {
    %c0_i32 = arith.constant 0 : i32
    %c0_i32_0 = arith.constant 0 : i32
    %c0_i32_1 = arith.constant 0 : i32
    return %c0_i32, %c0_i32_0 : i32, i32
  }
  func.func @transform_2(%arg0: i32) -> (i32, i32) {
    %c0_i32 = arith.constant 0 : i32
    %c0_i32_0 = arith.constant 0 : i32
    %c0_i32_1 = arith.constant 0 : i32
    return %c0_i32, %c0_i32_0 : i32, i32
  }
  func.func @transform_3(%arg0: i32) -> (i32, i32) {
    %c0_i32 = arith.constant 0 : i32
    %c0_i32_0 = arith.constant 0 : i32
    %c0_i32_1 = arith.constant 0 : i32
    return %c0_i32, %c0_i32_0 : i32, i32
  }
  func.func @transform_4(%arg0: i32) -> (i32, i32) {
    %c0_i32 = arith.constant 0 : i32
    %c0_i32_0 = arith.constant 0 : i32
    return %arg0, %c0_i32 : i32, i32
  }
}

</mosaic_0001>

<llo_original>
// kernel: tpu_custom_call.1
$region0: #{tpu_custom_call.1}
  #allocation0 [shape = 'u32[]', space=smem, size = 0x4, offset = 0x4, fixed_abs, tag = 'smem constant byte address 0x4 - core index']
  #allocation1 [shape = 'u32[72,128]{1,0:T(1,128)}', space=vmem, size = 0x9000, scoped, tag = 'internal scratch']
  %s0 = inlined_call_operand.vmem [shape: f32[2,256], index: 0, kind: input, shape index: {}]
  %s1 = inlined_call_operand.vmem [shape: bf16[256,8], index: 1, kind: input, shape index: {}]
  %s2 = inlined_call_operand.vmem [shape: bf16[8,256], index: 2, kind: input, shape index: {}]
  %s3 = inlined_call_operand.vmem [shape: bf16[256,32], index: 3, kind: input, shape index: {}]
  %s4 = inlined_call_operand.hbm [shape: f32[2,32], index: 4, kind: output, shape index: {}]
  %s5 = sld [smem:[#allocation0]]
  $region26: #{tpu_custom_call.1} parent=0
    _
  %s7 = ssub.s32 1, %s5
  %s8 = scalar_select 0, %s7, %s5
  $region1: #{tpu_custom_call.1} parent=0
    #allocation2 [shape = 'u8[1024]{0}', space=vmem, size = 0x400, scoped, tag = 'output window, operand 0, single buffered']
    #allocation3 [shape = 's32[1]{0}', space=sflag, size = 0x4, scoped, tag = 'scoped memory for tpu_custom_call.1']
    %9 = vsyncpa [#allocation3], 0
    // Predicated region
    $region2: #{tpu_custom_call.1} parent=1 // pred_check
      _
    $region3: #{tpu_custom_call.1} parent=1 // pred_check_branch
      %11 = sbr.rel (0) target = $region5
    $region4: #{tpu_custom_call.1} parent=1 // pred_region
      _
    $region5: #{tpu_custom_call.1} parent=1 // pred_fallthru
      _
    // Predicated region
    $region6: #{tpu_custom_call.1} parent=1 // pred_check
      _
    $region7: #{tpu_custom_call.1} parent=1 // pred_check_branch
      %13 = sbr.rel (0) target = $region9
    $region8: #{tpu_custom_call.1} parent=1 // pred_region
      _
    $region9: #{tpu_custom_call.1} parent=1 // pred_fallthru
      _
    // Predicated region
    $region10: #{tpu_custom_call.1} parent=1 // pred_check
      _
    $region11: #{tpu_custom_call.1} parent=1 // pred_check_branch
      %15 = sbr.rel (0) target = $region13
    $region12: #{tpu_custom_call.1} parent=1 // pred_region
      _
    $region13: #{tpu_custom_call.1} parent=1 // pred_fallthru
      _
    // Predicated region
    $region14: #{tpu_custom_call.1} parent=1 // pred_check
      _
    $region15: #{tpu_custom_call.1} parent=1 // pred_check_branch
      %17 = sbr.rel (0) target = $region17
    $region16: #{tpu_custom_call.1} parent=1 // pred_region
      _
    $region17: #{tpu_custom_call.1} parent=1 // pred_fallthru
      _
    %v19 = vld [vmem:[%s0] sm:$0xf]
    %21 = vst [vmem:[#allocation1] ss:$4 sm:$0xff] %v19
    %v22 = vld.sshfl [vmem:[#allocation1] sm:$0xff pattern:$0x73625140]
    %v23 = vld.sshfl [vmem:[#allocation1 + $0x8] sm:$0xff pattern:$0x73625140]
    %v26 = vpack.c.bf16 %v22, %v22
    %v27 = vpack.c.bf16 %v23, %v23
    %v28 = vld [vmem:[%s1] sm:$0xf]
    %v29 = vld [vmem:[%s1 + $0x4] sm:$0xf]
    %v30 = vld [vmem:[%s1 + $0x8] sm:$0xf]
    %v31 = vld [vmem:[%s1 + $0xc] sm:$0xf]
    %v32 = vld [vmem:[%s1 + $0x10] sm:$0xf]
    %v33 = vld [vmem:[%s1 + $0x14] sm:$0xf]
    %v34 = vld [vmem:[%s1 + $0x18] sm:$0xf]
    %v35 = vld [vmem:[%s1 + $0x1c] sm:$0xf]
    %v36 = vld [vmem:[%s1 + $0x20] sm:$0xf]
    %v37 = vld [vmem:[%s1 + $0x24] sm:$0xf]
    %v38 = vld [vmem:[%s1 + $0x28] sm:$0xf]
    %v39 = vld [vmem:[%s1 + $0x2c] sm:$0xf]
    %v40 = vld [vmem:[%s1 + $0x30] sm:$0xf]
    %v41 = vld [vmem:[%s1 + $0x34] sm:$0xf]
    %v42 = vld [vmem:[%s1 + $0x38] sm:$0xf]
    %v43 = vld [vmem:[%s1 + $0x3c] sm:$0xf]
    %v44 = vld [vmem:[%s1 + $0x40] sm:$0xf]
    %v45 = vld [vmem:[%s1 + $0x44] sm:$0xf]
    %v46 = vld [vmem:[%s1 + $0x48] sm:$0xf]
    %v47 = vld [vmem:[%s1 + $0x4c] sm:$0xf]
    %v48 = vld [vmem:[%s1 + $0x50] sm:$0xf]
    %v49 = vld [vmem:[%s1 + $0x54] sm:$0xf]
    %v50 = vld [vmem:[%s1 + $0x58] sm:$0xf]
    %v51 = vld [vmem:[%s1 + $0x5c] sm:$0xf]
    %v52 = vld [vmem:[%s1 + $0x60] sm:$0xf]
    %v53 = vld [vmem:[%s1 + $0x64] sm:$0xf]
    %v54 = vld [vmem:[%s1 + $0x68] sm:$0xf]
    %v55 = vld [vmem:[%s1 + $0x6c] sm:$0xf]
    %v56 = vld [vmem:[%s1 + $0x70] sm:$0xf]
    %v57 = vld [vmem:[%s1 + $0x74] sm:$0xf]
    %v58 = vld [vmem:[%s1 + $0x78] sm:$0xf]
    %v59 = vld [vmem:[%s1 + $0x7c] sm:$0xf]
    %v92 = vunpack.c.l.b16 %v28
    %v93 = vunpack.c.l.b16 %v29
    %v94 = vunpack.c.l.b16 %v30
    %v95 = vunpack.c.l.b16 %v31
    %v96 = vunpack.c.l.b16 %v32
    %v97 = vunpack.c.l.b16 %v33
    %v98 = vunpack.c.l.b16 %v34
    %v99 = vunpack.c.l.b16 %v35
    %v100 = vunpack.c.l.b16 %v36
    %v101 = vunpack.c.l.b16 %v37
    %v102 = vunpack.c.l.b16 %v38
    %v103 = vunpack.c.l.b16 %v39
    %v104 = vunpack.c.l.b16 %v40
    %v105 = vunpack.c.l.b16 %v41
    %v106 = vunpack.c.l.b16 %v42
    %v107 = vunpack.c.l.b16 %v43
    %v108 = vunpack.c.l.b16 %v44
    %v109 = vunpack.c.l.b16 %v45
    %v110 = vunpack.c.l.b16 %v46
    %v111 = vunpack.c.l.b16 %v47
    %v112 = vunpack.c.l.b16 %v48
    %v113 = vunpack.c.l.b16 %v49
    %v114 = vunpack.c.l.b16 %v50
    %v115 = vunpack.c.l.b16 %v51
    %v116 = vunpack.c.l.b16 %v52
    %v117 = vunpack.c.l.b16 %v53
    %v118 = vunpack.c.l.b16 %v54
    %v119 = vunpack.c.l.b16 %v55
    %v120 = vunpack.c.l.b16 %v56
    %v121 = vunpack.c.l.b16 %v57
    %v122 = vunpack.c.l.b16 %v58
    %v123 = vunpack.c.l.b16 %v59
    %v124 = vpack.c.b16 %v93, %v92
    %v125 = vpack.c.b16 %v95, %v94
    %v126 = vpack.c.b16 %v97, %v96
    %v127 = vpack.c.b16 %v99, %v98
    %v128 = vpack.c.b16 %v101, %v100
    %v129 = vpack.c.b16 %v103, %v102
    %v130 = vpack.c.b16 %v105, %v104
    %v131 = vpack.c.b16 %v107, %v106
    %v132 = vpack.c.b16 %v109, %v108
    %v133 = vpack.c.b16 %v111, %v110
    %v134 = vpack.c.b16 %v113, %v112
    %v135 = vpack.c.b16 %v115, %v114
    %v136 = vpack.c.b16 %v117, %v116
    %v137 = vpack.c.b16 %v119, %v118
    %v138 = vpack.c.b16 %v121, %v120
    %v139 = vpack.c.b16 %v123, %v122
    %156 = vmatpush.bf16.msra.mxu0 %v131
    %157 = vmatpush.bf16.msra.mxu0 %v130
    %158 = vmatpush.bf16.msra.mxu0 %v129
    %159 = vmatpush.bf16.msra.mxu0 %v128
    %160 = vmatpush.bf16.msra.mxu0 %v127
    %161 = vmatpush.bf16.msra.mxu0 %v126
    %162 = vmatpush.bf16.msra.mxu0 %v125
    %163 = vmatpush.bf16.msra.mxu0 %v124
    %164 = vmatmul.bf16.gmra.mxu0 %v26
    %v165 = vpop.f32.mrf.mxu0
    %v166 = vadd.f32 0.0, %v165
    %v167 = vpop.f32.mrf.mxu0
    %168 = vdwg.mxu0
    %169 = vmatpush.bf16.msra.mxu0 %v139
    %170 = vmatpush.bf16.msra.mxu0 %v138
    %171 = vmatpush.bf16.msra.mxu0 %v137
    %172 = vmatpush.bf16.msra.mxu0 %v136
    %173 = vmatpush.bf16.msra.mxu0 %v135
    %174 = vmatpush.bf16.msra.mxu0 %v134
    %175 = vmatpush.bf16.msra.mxu0 %v133
    %176 = vmatpush.bf16.msra.mxu0 %v132
    %177 = vmatmul.bf16.gmra.mxu0 %v27
    %v178 = vpop.f32.mrf.mxu0
    %v179 = vadd.f32 %v166, %v178
    %v180 = vpop.f32.mrf.mxu0
    %181 = vdwg.mxu0
    %vm182 = vcmask 58368
    %v183 = vsel %vm182, %v179, -inf
    %184 = vmax.xlane.f32.xlu0 %v183
    %v185 = vpop.xlane.xlu0 %184
    %v186 = vsub.f32 %v179, %v185
    %v187 = vmul.f32 %v186, 1.442695
    %v188 = vpow.pop %v187
    %v189 = vsel %vm182, %v188, 0.0
    %190 = vadd.xlane.f32.xlu0 %v189
    %v191 = vpop.xlane.xlu0 %190
    %v192 = vpack.c.bf16 %v188, %v188
    %v193 = vld [vmem:[%s2] sm:$0xff]
    %v195 = vunpack.c.l.b16 %v193
    %v196 = vunpack.c.h.b16 %v193
    %v197 = vpack.c.b16 %v195, %v195
    %v198 = vpack.c.b16 %v196, %v196
    %vm199 = vcmask 64512
    %v201 = vsel %vm199, %v192, 0
    %vm203 = vcmask 1043456
    %v205 = vsel %vm203, %v197, 0
    %v208 = vsel %vm203, %v198, 0
    %210 = vmatpush.bf16.msra.mxu0 0
    %211 = vmatpush.bf16.msra.mxu0 0
    %212 = vmatpush.bf16.msra.mxu0 0
    %213 = vmatpush.bf16.msra.mxu0 0
    %214 = vmatpush.bf16.msra.mxu0 0
    %215 = vmatpush.bf16.msra.mxu0 0
    %216 = vmatpush.bf16.msra.mxu0 0
    %217 = vmatpush.bf16.msra.mxu0 %v205
    %218 = vmatmul.bf16.gmra.mxu0 %v201
    %v219 = vpop.f32.mrf.mxu0
    %v220 = vadd.f32 0.0, %v219
    %v221 = vpop.f32.mrf.mxu0
    %222 = vdwg.mxu0
    %223 = vmatpush.bf16.msra.mxu0 0
    %224 = vmatpush.bf16.msra.mxu0 0
    %225 = vmatpush.bf16.msra.mxu0 0
    %226 = vmatpush.bf16.msra.mxu0 0
    %227 = vmatpush.bf16.msra.mxu0 0
    %228 = vmatpush.bf16.msra.mxu0 0
    %229 = vmatpush.bf16.msra.mxu0 0
    %230 = vmatpush.bf16.msra.mxu0 %v208
    %231 = vmatmul.bf16.gmra.mxu0 %v201
    %v232 = vpop.f32.mrf.mxu0
    %v233 = vadd.f32 0.0, %v232
    %v234 = vpop.f32.mrf.mxu0
    %235 = vdwg.mxu0
    %236 = vst [vmem:[#allocation1] ss:$4 sm:$0xff] %v19
    %v237 = vld.sshfl [vmem:[#allocation1] sm:$0xff pattern:$0x73625140]
    %v238 = vld.sshfl [vmem:[#allocation1 + $0x8] sm:$0xff pattern:$0x73625140]
    %v241 = vmul.f32 %v220, %v237
    %v242 = vmul.f32 %v233, %v238
    %v243 = vpack.c.bf16 %v241, %v241
    %v244 = vpack.c.bf16 %v242, %v242
    %v245 = vld [vmem:[%s3] sm:$0xf]
    %v246 = vld [vmem:[%s3 + $0x4] sm:$0xf]
    %v247 = vld [vmem:[%s3 + $0x8] sm:$0xf]
    %v248 = vld [vmem:[%s3 + $0xc] sm:$0xf]
    %v249 = vld [vmem:[%s3 + $0x10] sm:$0xf]
    %v250 = vld [vmem:[%s3 + $0x14] sm:$0xf]
    %v251 = vld [vmem:[%s3 + $0x18] sm:$0xf]
    %v252 = vld [vmem:[%s3 + $0x1c] sm:$0xf]
    %v253 = vld [vmem:[%s3 + $0x20] sm:$0xf]
    %v254 = vld [vmem:[%s3 + $0x24] sm:$0xf]
    %v255 = vld [vmem:[%s3 + $0x28] sm:$0xf]
    %v256 = vld [vmem:[%s3 + $0x2c] sm:$0xf]
    %v257 = vld [vmem:[%s3 + $0x30] sm:$0xf]
    %v258 = vld [vmem:[%s3 + $0x34] sm:$0xf]
    %v259 = vld [vmem:[%s3 + $0x38] sm:$0xf]
    %v260 = vld [vmem:[%s3 + $0x3c] sm:$0xf]
    %v261 = vld [vmem:[%s3 + $0x40] sm:$0xf]
    %v262 = vld [vmem:[%s3 + $0x44] sm:$0xf]
    %v263 = vld [vmem:[%s3 + $0x48] sm:$0xf]
    %v264 = vld [vmem:[%s3 + $0x4c] sm:$0xf]
    %v265 = vld [vmem:[%s3 + $0x50] sm:$0xf]
    %v266 = vld [vmem:[%s3 + $0x54] sm:$0xf]
    %v267 = vld [vmem:[%s3 + $0x58] sm:$0xf]
    %v268 = vld [vmem:[%s3 + $0x5c] sm:$0xf]
    %v269 = vld [vmem:[%s3 + $0x60] sm:$0xf]
    %v270 = vld [vmem:[%s3 + $0x64] sm:$0xf]
    %v271 = vld [vmem:[%s3 + $0x68] sm:$0xf]
    %v272 = vld [vmem:[%s3 + $0x6c] sm:$0xf]
    %v273 = vld [vmem:[%s3 + $0x70] sm:$0xf]
    %v274 = vld [vmem:[%s3 + $0x74] sm:$0xf]
    %v275 = vld [vmem:[%s3 + $0x78] sm:$0xf]
    %v276 = vld [vmem:[%s3 + $0x7c] sm:$0xf]
    %v309 = vunpack.c.l.b16 %v245
    %v310 = vunpack.c.l.b16 %v246
    %v311 = vunpack.c.l.b16 %v247
    %v312 = vunpack.c.l.b16 %v248
    %v313 = vunpack.c.l.b16 %v249
    %v314 = vunpack.c.l.b16 %v250
    %v315 = vunpack.c.l.b16 %v251
    %v316 = vunpack.c.l.b16 %v252
    %v317 = vunpack.c.l.b16 %v253
    %v318 = vunpack.c.l.b16 %v254
    %v319 = vunpack.c.l.b16 %v255
    %v320 = vunpack.c.l.b16 %v256
    %v321 = vunpack.c.l.b16 %v257
    %v322 = vunpack.c.l.b16 %v258
    %v323 = vunpack.c.l.b16 %v259
    %v324 = vunpack.c.l.b16 %v260
    %v325 = vunpack.c.l.b16 %v261
    %v326 = vunpack.c.l.b16 %v262
    %v327 = vunpack.c.l.b16 %v263
    %v328 = vunpack.c.l.b16 %v264
    %v329 = vunpack.c.l.b16 %v265
    %v330 = vunpack.c.l.b16 %v266
    %v331 = vunpack.c.l.b16 %v267
    %v332 = vunpack.c.l.b16 %v268
    %v333 = vunpack.c.l.b16 %v269
    %v334 = vunpack.c.l.b16 %v270
    %v335 = vunpack.c.l.b16 %v271
    %v336 = vunpack.c.l.b16 %v272
    %v337 = vunpack.c.l.b16 %v273
    %v338 = vunpack.c.l.b16 %v274
    %v339 = vunpack.c.l.b16 %v275
    %v340 = vunpack.c.l.b16 %v276
    %v341 = vpack.c.b16 %v310, %v309
    %v342 = vpack.c.b16 %v312, %v311
    %v343 = vpack.c.b16 %v314, %v313
    %v344 = vpack.c.b16 %v316, %v315
    %v345 = vpack.c.b16 %v318, %v317
    %v346 = vpack.c.b16 %v320, %v319
    %v347 = vpack.c.b16 %v322, %v321
    %v348 = vpack.c.b16 %v324, %v323
    %v349 = vpack.c.b16 %v326, %v325
    %v350 = vpack.c.b16 %v328, %v327
    %v351 = vpack.c.b16 %v330, %v329
    %v352 = vpack.c.b16 %v332, %v331
    %v353 = vpack.c.b16 %v334, %v333
    %v354 = vpack.c.b16 %v336, %v335
    %v355 = vpack.c.b16 %v338, %v337
    %v356 = vpack.c.b16 %v340, %v339
    %373 = vmatpush.bf16.msra.mxu0 %v348
    %374 = vmatpush.bf16.msra.mxu0 %v347
    %375 = vmatpush.bf16.msra.mxu0 %v346
    %376 = vmatpush.bf16.msra.mxu0 %v345
    %377 = vmatpush.bf16.msra.mxu0 %v344
    %378 = vmatpush.bf16.msra.mxu0 %v343
    %379 = vmatpush.bf16.msra.mxu0 %v342
    %380 = vmatpush.bf16.msra.mxu0 %v341
    %381 = vmatmul.bf16.gmra.mxu0 %v243
    %v382 = vpop.f32.mrf.mxu0
    %v383 = vadd.f32 0.0, %v382
    %v384 = vpop.f32.mrf.mxu0
    %385 = vdwg.mxu0
    %386 = vmatpush.bf16.msra.mxu0 %v356
    %387 = vmatpush.bf16.msra.mxu0 %v355
    %388 = vmatpush.bf16.msra.mxu0 %v354
    %389 = vmatpush.bf16.msra.mxu0 %v353
    %390 = vmatpush.bf16.msra.mxu0 %v352
    %391 = vmatpush.bf16.msra.mxu0 %v351
    %392 = vmatpush.bf16.msra.mxu0 %v350
    %393 = vmatpush.bf16.msra.mxu0 %v349
    %394 = vmatmul.bf16.gmra.mxu0 %v244
    %v395 = vpop.f32.mrf.mxu0
    %v396 = vadd.f32 %v383, %v395
    %v397 = vpop.f32.mrf.mxu0
    %398 = vdwg.mxu0
    %v399 = vrcp.pop %v191
    %v400 = vmul.f32 %v396, %v399
    %vm401 = vcmask 254976
    %402 = vst.msk [vmem:[#allocation2] sm:$0x3] %vm401, %v400
    // Predicated region
    $region18: #{tpu_custom_call.1} parent=1 // pred_check
      _
    $region19: #{tpu_custom_call.1} parent=1 // pred_check_branch
      %404 = sbr.rel (0) target = $region21
    $region20: #{tpu_custom_call.1} parent=1 // pred_region
      %406 = vsyncadd [#allocation3], 0
      %s408 = sshll.u32 [#allocation2], 4
      %s409 = int_to_ptr.vmem [resolvable:$true] %s408
      %s410 = sshll.u32 %s4, 4
      %s411 = int_to_ptr.hbm [resolvable:$true] %s410
      %413 = dma.vmem_to_hbm [thread:$0]  %s409, 32, %s411, [#allocation3]
    $region21: #{tpu_custom_call.1} parent=1 // pred_fallthru
      _
    // Predicated region
    $region22: #{tpu_custom_call.1} parent=1 // pred_check
      _
    $region23: #{tpu_custom_call.1} parent=1 // pred_check_branch
      %415 = sbr.rel (0) target = $region25
    $region24: #{tpu_custom_call.1} parent=1 // pred_region
      %417 = dma.done [#allocation3], 32
    $region25: #{tpu_custom_call.1} parent=1 // pred_fallthru
      _
    %418 = vsyncpa [#allocation3], 1

</llo_original>
